<compile_context>
chip_gen: v7x
topology: tpu7x:2x2x1
jax: 0.10.0
libtpu: 0.0.40
codegen_flags: <defaults>
</compile_context>

<pallas_src>
import functools
import numpy as np
import jax
import jax.numpy as jnp
from jax.experimental import pallas as pl
from jax.experimental.pallas import tpu as pltpu

_VMEM = pl.BlockSpec(memory_space=pltpu.MemorySpace.VMEM)


# ------------------------------------------------------------------ kernel ---
def _fused_kernel(x_ref, labc_ref, labr_ref,
                  w1_ref, b1_ref, w2_ref, b2_ref,
                  wc_ref, bc_ref, wd_ref, bd_ref,
                  loss_ref, *, n_s, n_t, num_1, num_classes, temperature):
    n = n_s + n_t

    # ---- feature extractor: Linear -> ReLU -> Linear -> ReLU ---------------
    x = x_ref[...]                                                  # (n, D)
    h = jnp.maximum(
        jnp.dot(x, w1_ref[...], preferred_element_type=jnp.float32) + b1_ref[...], 0.0)
    f = jnp.maximum(
        jnp.dot(h, w2_ref[...], preferred_element_type=jnp.float32) + b2_ref[...], 0.0)

    # ---- classifier logits + per-row cross entropy --------------------------
    logits = jnp.dot(f, wc_ref[...], preferred_element_type=jnp.float32) + bc_ref[...]
    c = num_classes
    lmax = jnp.max(logits, axis=-1, keepdims=True)
    z = jnp.exp(logits - lmax)
    zsum = jnp.sum(z, axis=-1, keepdims=True)
    lse = lmax + jnp.log(zsum)
    cls_iota = jax.lax.broadcasted_iota(jnp.int32, (n, c), 1)
    onehot = (labc_ref[...] == cls_iota).astype(jnp.float32)
    picked = jnp.sum(onehot * logits, axis=-1, keepdims=True)
    ce_row = lse - picked                                           # (n, 1)

    row_id = jax.lax.broadcasted_iota(jnp.int32, (n, 1), 0)
    is_s = (row_id < n_s).astype(jnp.float32)
    is_t = 1.0 - is_s
    # class_loss = CE(s_logits, s_labels) + CE(t_logits, t_pseudo_labels)
    class_loss = (jnp.sum(ce_row * is_s) * (1.0 / n_s)
                  + jnp.sum(ce_row * is_t) * (1.0 / n_t))

    # ---- select top-num_1 target rows by p_prob (in-kernel rank counting) ---
    probs = z / zsum                                                # softmax rows
    head = (cls_iota < (num_classes - 1)).astype(jnp.float32)
    p_prob = jnp.sum(probs * head, axis=-1, keepdims=True)          # (n, 1)

    rid = jax.lax.broadcasted_iota(jnp.int32, (n, n), 0)
    cid = jax.lax.broadcasted_iota(jnp.int32, (n, n), 1)
    eye = (rid == cid).astype(jnp.float32)
    # "matmul transpose": p_row_mat[i, j] = p_prob[j]  (avoids XLU transpose of (n,1))
    p_row_mat = jnp.dot(jnp.ones((n, n), jnp.float32), p_prob * eye,
                        preferred_element_type=jnp.float32)
    greater = p_row_mat > p_prob                                    # p[j] >  p[i]
    tie_before = (p_row_mat == p_prob) & (cid < rid)                # stable tie-break
    in_t_col = cid >= n_s
    rank = jnp.sum((in_t_col & (greater | tie_before)).astype(jnp.float32),
                   axis=-1, keepdims=True)                          # desc. rank in t
    sel_t = ((row_id >= n_s) & (rank < num_1)).astype(jnp.float32)  # (n, 1)

    # ---- domain discriminator CE: label 0 = source rows, 1 = selected target
    d_logits = jnp.dot(f, wd_ref[...], preferred_element_type=jnp.float32) + bd_ref[...]
    dmax = jnp.max(d_logits, axis=-1, keepdims=True)
    dlse = dmax + jnp.log(jnp.sum(jnp.exp(d_logits - dmax), axis=-1, keepdims=True))
    dom_iota = jax.lax.broadcasted_iota(jnp.int32, (n, 2), 1)
    pick0 = jnp.sum(d_logits * (dom_iota == 0).astype(jnp.float32), axis=-1, keepdims=True)
    pick1 = jnp.sum(d_logits * (dom_iota == 1).astype(jnp.float32), axis=-1, keepdims=True)
    domain_loss = (jnp.sum((dlse - pick0) * is_s)
                   + jnp.sum((dlse - pick1) * sel_t)) * (1.0 / (n_s + num_1))

    # ---- SupCon loss over all 2B features (single view, temp == base_temp) ---
    sumsq = jnp.sum(f * f, axis=-1, keepdims=True)
    fn = f * jax.lax.rsqrt(jnp.maximum(sumsq, 1e-24))               # F.normalize(dim=-1)
    sim = jax.lax.dot_general(fn, fn, (((1,), (1,)), ((), ())),
                              preferred_element_type=jnp.float32) * (1.0 / temperature)
    not_self = 1.0 - eye
    same_label = (labc_ref[...] == labr_ref[...]).astype(jnp.float32)
    pos_mask = same_label * not_self
    smax = jnp.max(sim, axis=-1, keepdims=True)
    slog = sim - smax
    exp_s = jnp.exp(slog) * not_self
    log_prob = slog - jnp.log(jnp.sum(exp_s, axis=-1, keepdims=True))
    pos_cnt = jnp.sum(pos_mask, axis=-1, keepdims=True)
    # clamp denominator: anchors with no positive contribute 0 instead of NaN
    mean_log_prob_pos = (jnp.sum(pos_mask * log_prob, axis=-1, keepdims=True)
                         / jnp.maximum(pos_cnt, 1.0))
    cl_loss = jnp.mean(-mean_log_prob_pos)

    total = class_loss + (domain_loss + cl_loss) * 1.0
    loss_ref[...] = jnp.reshape(total, (1, 1))


# ----------------------------------------------------------------- padding ---
def _pad_cols(a, mult=128):
    pad = (-a.shape[1]) % mult
    return a if pad == 0 else jnp.pad(a, ((0, 0), (0, pad)))


def _pad_rows(a, mult=128):
    pad = (-a.shape[0]) % mult
    return a if pad == 0 else jnp.pad(a, ((0, pad), (0, 0)))


# ------------------------------------------------------------ full forward ---
@functools.partial(jax.jit, static_argnames=("num_classes", "adapt"))
def safaari_forward(params, s_inputs, s_outputs, t_inputs, t_pseudo_outputs,
                    num_classes, alpha=1.0, adapt=False):
    if adapt:
        # TODO(synk): adapt=True path (SupCon on source only, 0.01 weighting,
        # epoch>0 open-set pseudo labelling + per-class cdist cluster loss) uses
        # dynamic boolean-mask gathers; not implemented as a Pallas kernel.
        raise NotImplementedError("adapt=True path not implemented")
    (w1, b1, w2, b2, wc, bc, wd, bd) = params
    n_s, n_t = s_inputs.shape[0], t_inputs.shape[0]
    num_1 = int(n_s * 0.7)

    # Pad hidden width (168 -> 256) so the intermediate h is lane-dense; the
    # zero padding is exact (padded cols hit zero rows of w2).
    w1p, b1p, w2p = _pad_cols(w1), _pad_cols(b1), _pad_rows(w2)

    x = jnp.concatenate([s_inputs, t_inputs], axis=0).astype(jnp.float32)
    labels = jnp.concatenate([s_outputs, t_pseudo_outputs], axis=0).astype(jnp.int32)
    lab_col = labels.reshape(-1, 1)
    lab_row = labels.reshape(1, -1)

    kern = functools.partial(_fused_kernel, n_s=n_s, n_t=n_t, num_1=num_1,
                             num_classes=num_classes, temperature=0.07)
    loss = pl.pallas_call(
        kern,
        out_shape=jax.ShapeDtypeStruct((1, 1), jnp.float32),
        in_specs=[_VMEM] * 11,
        out_specs=_VMEM,
        compiler_params=pltpu.CompilerParams(vmem_limit_bytes=32 * 1024 * 1024),
    )(x, lab_col, lab_row, w1p, b1p, w2p, b2, wc, bc, wd, bd)
    # ReverseLayerF is identity in the forward pass; `alpha` only scales the
    # reversed gradient (needs a custom_vjp for training).
    return loss[0, 0]


# --------------------------------------------------------------- parameters --
def init_params(key, input_dim, width, bottleneck_width, num_classes):
    def linear(k, fan_in, fan_out):
        kw, kb = jax.random.split(k)
        bound = 1.0 / np.sqrt(fan_in)
        w = jax.random.uniform(kw, (fan_in, fan_out), jnp.float32, -bound, bound)
        b = jax.random.uniform(kb, (1, fan_out), jnp.float32, -bound, bound)
        return w, b

    k1, k2, k3, k4 = jax.random.split(key, 4)
    w1, b1 = linear(k1, input_dim, width)                 # feature_extractor[0]
    w2, b2 = linear(k2, width, bottleneck_width)          # feature_extractor[2]
    wc, bc = linear(k3, bottleneck_width, num_classes)    # classifier_layer
    wd, bd = linear(k4, bottleneck_width, 2)              # discriminator
    return (w1, b1, w2, b2, wc, bc, wd, bd)


if __name__ == "__main__":
    num_classes = 4
    input_dim = 16
    width = 168            # module default
    bottleneck_width = 32  # module default
    batch = 8

    key = jax.random.PRNGKey(0)
    kp, ks, kt = jax.random.split(key, 3)
    params = init_params(kp, input_dim, width, bottleneck_width, num_classes)

    s_inputs = jax.random.normal(ks, (batch, input_dim), jnp.float32)
    t_inputs = jax.random.normal(kt, (batch, input_dim), jnp.float32)
    # deterministic labels; every class appears >=2 times in the combined set
    # so SupConLoss's positive-pair denominator is never zero.
    s_outputs = jnp.array([0, 1, 2, 3, 0, 1, 2, 3], dtype=jnp.int32)
    t_pseudo_outputs = jnp.array([0, 1, 2, 3, 3, 2, 1, 0], dtype=jnp.int32)

    loss = safaari_forward(params, s_inputs, s_outputs, t_inputs,
                           t_pseudo_outputs, num_classes, alpha=1.0, adapt=False)
    loss = jax.block_until_ready(loss)
    assert jnp.isfinite(loss), f"non-finite loss: {loss}"
    print("KERNEL_OK")
</pallas_src>

<mosaic_0001>
module attributes {stable_mosaic.version = 11 : i64} {
  func.func @_fused_kernel(%arg0: memref<16x16xf32, #tpu.memory_space<vmem>>, %arg1: memref<16x1xi32, #tpu.memory_space<vmem>>, %arg2: memref<1x16xi32, #tpu.memory_space<vmem>>, %arg3: memref<16x256xf32, #tpu.memory_space<vmem>>, %arg4: memref<1x256xf32, #tpu.memory_space<vmem>>, %arg5: memref<256x32xf32, #tpu.memory_space<vmem>>, %arg6: memref<1x32xf32, #tpu.memory_space<vmem>>, %arg7: memref<32x4xf32, #tpu.memory_space<vmem>>, %arg8: memref<1x4xf32, #tpu.memory_space<vmem>>, %arg9: memref<32x2xf32, #tpu.memory_space<vmem>>, %arg10: memref<1x2xf32, #tpu.memory_space<vmem>>, %arg11: memref<1x1xf32, #tpu.memory_space<vmem>>) attributes {dimension_semantics = [], scalar_prefetch = 0 : i64, scratch_operands = 0 : i64, tpu.core_type = #tpu.core_type<tc>} {
    %c0 = arith.constant 0 : index
    %c0_0 = arith.constant 0 : index
    %0 = vector.load %arg0[%c0, %c0_0] : memref<16x16xf32, #tpu.memory_space<vmem>>, vector<16x16xf32>
    %c0_1 = arith.constant 0 : index
    %c0_2 = arith.constant 0 : index
    %1 = vector.load %arg3[%c0_1, %c0_2] : memref<16x256xf32, #tpu.memory_space<vmem>>, vector<16x256xf32>
    %cst = arith.constant dense<0.000000e+00> : vector<16x256xf32>
    %2 = tpu.matmul %0, %1, %cst {dimension_numbers = #tpu.dot_dimension_numbers<[1], [0], [0], [1], [0, 0, 1, 1], [], []>} : vector<16x16xf32>, vector<16x256xf32>, vector<16x256xf32> -> vector<16x256xf32>
    %c0_3 = arith.constant 0 : index
    %c0_4 = arith.constant 0 : index
    %3 = vector.load %arg4[%c0_3, %c0_4] : memref<1x256xf32, #tpu.memory_space<vmem>>, vector<1x256xf32>
    %4 = vector.broadcast %3 : vector<1x256xf32> to vector<16x256xf32>
    %5 = arith.addf %2, %4 : vector<16x256xf32>
    %cst_5 = arith.constant 0.000000e+00 : f32
    %6 = vector.broadcast %cst_5 : f32 to vector<16x256xf32>
    %7 = arith.maximumf %5, %6 : vector<16x256xf32>
    %c0_6 = arith.constant 0 : index
    %c0_7 = arith.constant 0 : index
    %8 = vector.load %arg5[%c0_6, %c0_7] : memref<256x32xf32, #tpu.memory_space<vmem>>, vector<256x32xf32>
    %cst_8 = arith.constant dense<0.000000e+00> : vector<16x32xf32>
    %9 = tpu.matmul %7, %8, %cst_8 {dimension_numbers = #tpu.dot_dimension_numbers<[1], [0], [0], [1], [0, 0, 1, 1], [], []>} : vector<16x256xf32>, vector<256x32xf32>, vector<16x32xf32> -> vector<16x32xf32>
    %c0_9 = arith.constant 0 : index
    %c0_10 = arith.constant 0 : index
    %10 = vector.load %arg6[%c0_9, %c0_10] : memref<1x32xf32, #tpu.memory_space<vmem>>, vector<1x32xf32>
    %11 = vector.broadcast %10 : vector<1x32xf32> to vector<16x32xf32>
    %12 = arith.addf %9, %11 : vector<16x32xf32>
    %cst_11 = arith.constant 0.000000e+00 : f32
    %13 = vector.broadcast %cst_11 : f32 to vector<16x32xf32>
    %14 = arith.maximumf %12, %13 : vector<16x32xf32>
    %c0_12 = arith.constant 0 : index
    %c0_13 = arith.constant 0 : index
    %15 = vector.load %arg7[%c0_12, %c0_13] : memref<32x4xf32, #tpu.memory_space<vmem>>, vector<32x4xf32>
    %cst_14 = arith.constant dense<0.000000e+00> : vector<16x4xf32>
    %16 = tpu.matmul %14, %15, %cst_14 {dimension_numbers = #tpu.dot_dimension_numbers<[1], [0], [0], [1], [0, 0, 1, 1], [], []>} : vector<16x32xf32>, vector<32x4xf32>, vector<16x4xf32> -> vector<16x4xf32>
    %c0_15 = arith.constant 0 : index
    %c0_16 = arith.constant 0 : index
    %17 = vector.load %arg8[%c0_15, %c0_16] : memref<1x4xf32, #tpu.memory_space<vmem>>, vector<1x4xf32>
    %18 = vector.broadcast %17 : vector<1x4xf32> to vector<16x4xf32>
    %19 = arith.addf %16, %18 : vector<16x4xf32>
    %cst_17 = arith.constant dense<0xFF800000> : vector<16xf32>
    %20 = vector.multi_reduction <maximumf>, %19, %cst_17 [1] : vector<16x4xf32> to vector<16xf32>
    %21 = vector.shape_cast %20 : vector<16xf32> to vector<16x1xf32>
    %22 = vector.broadcast %21 : vector<16x1xf32> to vector<16x4xf32>
    %23 = arith.subf %19, %22 : vector<16x4xf32>
    %24 = math.exp %23 : vector<16x4xf32>
    %cst_18 = arith.constant dense<0.000000e+00> : vector<16xf32>
    %25 = vector.multi_reduction <add>, %24, %cst_18 [1] : vector<16x4xf32> to vector<16xf32>
    %26 = vector.shape_cast %25 : vector<16xf32> to vector<16x1xf32>
    %27 = math.log %26 : vector<16x1xf32>
    %28 = arith.addf %21, %27 : vector<16x1xf32>
    %29 = tpu.iota {dimensions = array<i32: 1>} : vector<16x4xi32>
    %c0_19 = arith.constant 0 : index
    %c0_20 = arith.constant 0 : index
    %30 = vector.load %arg1[%c0_19, %c0_20] : memref<16x1xi32, #tpu.memory_space<vmem>>, vector<16x1xi32>
    %31 = vector.broadcast %30 : vector<16x1xi32> to vector<16x4xi32>
    %32 = arith.cmpi eq, %31, %29 : vector<16x4xi32>
    %33 = arith.extui %32 : vector<16x4xi1> to vector<16x4xi32>
    %34 = arith.sitofp %33 : vector<16x4xi32> to vector<16x4xf32>
    %35 = arith.mulf %34, %19 : vector<16x4xf32>
    %cst_21 = arith.constant dense<0.000000e+00> : vector<16xf32>
    %36 = vector.multi_reduction <add>, %35, %cst_21 [1] : vector<16x4xf32> to vector<16xf32>
    %37 = vector.shape_cast %36 : vector<16xf32> to vector<16x1xf32>
    %38 = arith.subf %28, %37 : vector<16x1xf32>
    %39 = tpu.iota {dimensions = array<i32: 0>} : vector<16x1xi32>
    %c8_i32 = arith.constant 8 : i32
    %40 = vector.broadcast %c8_i32 : i32 to vector<16x1xi32>
    %41 = arith.cmpi slt, %39, %40 : vector<16x1xi32>
    %42 = arith.extui %41 : vector<16x1xi1> to vector<16x1xi32>
    %43 = arith.sitofp %42 : vector<16x1xi32> to vector<16x1xf32>
    %cst_22 = arith.constant 1.000000e+00 : f32
    %44 = vector.broadcast %cst_22 : f32 to vector<16x1xf32>
    %45 = arith.subf %44, %43 : vector<16x1xf32>
    %46 = arith.mulf %38, %43 : vector<16x1xf32>
    %47 = vector.shape_cast %46 : vector<16x1xf32> to vector<1x16x1xf32>
    %cst_23 = arith.constant dense<0.000000e+00> : vector<1xf32>
    %48 = vector.multi_reduction <add>, %47, %cst_23 [1, 2] : vector<1x16x1xf32> to vector<1xf32>
    %49 = vector.shape_cast %48 : vector<1xf32> to vector<1x1x1xf32>
    %50 = vector.extract %49[0, 0, 0] : f32 from vector<1x1x1xf32>
    %cst_24 = arith.constant 1.250000e-01 : f32
    %51 = arith.mulf %50, %cst_24 : f32
    %52 = arith.mulf %38, %45 : vector<16x1xf32>
    %53 = vector.shape_cast %52 : vector<16x1xf32> to vector<1x16x1xf32>
    %cst_25 = arith.constant dense<0.000000e+00> : vector<1xf32>
    %54 = vector.multi_reduction <add>, %53, %cst_25 [1, 2] : vector<1x16x1xf32> to vector<1xf32>
    %55 = vector.shape_cast %54 : vector<1xf32> to vector<1x1x1xf32>
    %56 = vector.extract %55[0, 0, 0] : f32 from vector<1x1x1xf32>
    %cst_26 = arith.constant 1.250000e-01 : f32
    %57 = arith.mulf %56, %cst_26 : f32
    %58 = arith.addf %51, %57 : f32
    %59 = vector.broadcast %26 : vector<16x1xf32> to vector<16x4xf32>
    %60 = arith.divf %24, %59 : vector<16x4xf32>
    %c3_i32 = arith.constant 3 : i32
    %61 = vector.broadcast %c3_i32 : i32 to vector<16x4xi32>
    %62 = arith.cmpi slt, %29, %61 : vector<16x4xi32>
    %63 = arith.extui %62 : vector<16x4xi1> to vector<16x4xi32>
    %64 = arith.sitofp %63 : vector<16x4xi32> to vector<16x4xf32>
    %65 = arith.mulf %60, %64 : vector<16x4xf32>
    %cst_27 = arith.constant dense<0.000000e+00> : vector<16xf32>
    %66 = vector.multi_reduction <add>, %65, %cst_27 [1] : vector<16x4xf32> to vector<16xf32>
    %67 = vector.shape_cast %66 : vector<16xf32> to vector<16x1xf32>
    %68 = tpu.iota {dimensions = array<i32: 0>} : vector<16x16xi32>
    %69 = tpu.iota {dimensions = array<i32: 1>} : vector<16x16xi32>
    %70 = arith.cmpi eq, %68, %69 : vector<16x16xi32>
    %71 = arith.extui %70 : vector<16x16xi1> to vector<16x16xi32>
    %72 = arith.sitofp %71 : vector<16x16xi32> to vector<16x16xf32>
    %cst_28 = arith.constant 1.000000e+00 : f32
    %73 = vector.broadcast %cst_28 : f32 to vector<16x16xf32>
    %74 = vector.broadcast %67 : vector<16x1xf32> to vector<16x16xf32>
    %75 = arith.mulf %74, %72 : vector<16x16xf32>
    %cst_29 = arith.constant dense<0.000000e+00> : vector<16x16xf32>
    %76 = tpu.matmul %73, %75, %cst_29 {dimension_numbers = #tpu.dot_dimension_numbers<[1], [0], [0], [1], [0, 0, 1, 1], [], []>} : vector<16x16xf32>, vector<16x16xf32>, vector<16x16xf32> -> vector<16x16xf32>
    %77 = vector.broadcast %67 : vector<16x1xf32> to vector<16x16xf32>
    %78 = arith.cmpf ogt, %76, %77 : vector<16x16xf32>
    %79 = vector.broadcast %67 : vector<16x1xf32> to vector<16x16xf32>
    %80 = arith.cmpf oeq, %76, %79 : vector<16x16xf32>
    %81 = arith.cmpi slt, %69, %68 : vector<16x16xi32>
    %82 = arith.andi %80, %81 : vector<16x16xi1>
    %c8_i32_30 = arith.constant 8 : i32
    %83 = vector.broadcast %c8_i32_30 : i32 to vector<16x16xi32>
    %84 = arith.cmpi sge, %69, %83 : vector<16x16xi32>
    %85 = arith.ori %78, %82 : vector<16x16xi1>
    %86 = arith.andi %84, %85 : vector<16x16xi1>
    %87 = arith.extui %86 : vector<16x16xi1> to vector<16x16xi32>
    %88 = arith.sitofp %87 : vector<16x16xi32> to vector<16x16xf32>
    %cst_31 = arith.constant dense<0.000000e+00> : vector<16xf32>
    %89 = vector.multi_reduction <add>, %88, %cst_31 [1] : vector<16x16xf32> to vector<16xf32>
    %90 = vector.shape_cast %89 : vector<16xf32> to vector<16x1xf32>
    %c8_i32_32 = arith.constant 8 : i32
    %91 = vector.broadcast %c8_i32_32 : i32 to vector<16x1xi32>
    %92 = arith.cmpi sge, %39, %91 : vector<16x1xi32>
    %cst_33 = arith.constant 5.000000e+00 : f32
    %93 = vector.broadcast %cst_33 : f32 to vector<16x1xf32>
    %94 = arith.cmpf olt, %90, %93 : vector<16x1xf32>
    %95 = arith.andi %92, %94 : vector<16x1xi1>
    %96 = arith.extui %95 : vector<16x1xi1> to vector<16x1xi32>
    %97 = arith.sitofp %96 : vector<16x1xi32> to vector<16x1xf32>
    %c0_34 = arith.constant 0 : index
    %c0_35 = arith.constant 0 : index
    %98 = vector.load %arg9[%c0_34, %c0_35] : memref<32x2xf32, #tpu.memory_space<vmem>>, vector<32x2xf32>
    %cst_36 = arith.constant dense<0.000000e+00> : vector<16x2xf32>
    %99 = tpu.matmul %14, %98, %cst_36 {dimension_numbers = #tpu.dot_dimension_numbers<[1], [0], [0], [1], [0, 0, 1, 1], [], []>} : vector<16x32xf32>, vector<32x2xf32>, vector<16x2xf32> -> vector<16x2xf32>
    %c0_37 = arith.constant 0 : index
    %c0_38 = arith.constant 0 : index
    %100 = vector.load %arg10[%c0_37, %c0_38] : memref<1x2xf32, #tpu.memory_space<vmem>>, vector<1x2xf32>
    %101 = vector.broadcast %100 : vector<1x2xf32> to vector<16x2xf32>
    %102 = arith.addf %99, %101 : vector<16x2xf32>
    %cst_39 = arith.constant dense<0xFF800000> : vector<16xf32>
    %103 = vector.multi_reduction <maximumf>, %102, %cst_39 [1] : vector<16x2xf32> to vector<16xf32>
    %104 = vector.shape_cast %103 : vector<16xf32> to vector<16x1xf32>
    %105 = vector.broadcast %104 : vector<16x1xf32> to vector<16x2xf32>
    %106 = arith.subf %102, %105 : vector<16x2xf32>
    %107 = math.exp %106 : vector<16x2xf32>
    %cst_40 = arith.constant dense<0.000000e+00> : vector<16xf32>
    %108 = vector.multi_reduction <add>, %107, %cst_40 [1] : vector<16x2xf32> to vector<16xf32>
    %109 = vector.shape_cast %108 : vector<16xf32> to vector<16x1xf32>
    %110 = math.log %109 : vector<16x1xf32>
    %111 = arith.addf %104, %110 : vector<16x1xf32>
    %112 = tpu.iota {dimensions = array<i32: 1>} : vector<16x2xi32>
    %c0_i32 = arith.constant 0 : i32
    %113 = vector.broadcast %c0_i32 : i32 to vector<16x2xi32>
    %114 = arith.cmpi eq, %112, %113 : vector<16x2xi32>
    %115 = arith.extui %114 : vector<16x2xi1> to vector<16x2xi32>
    %116 = arith.sitofp %115 : vector<16x2xi32> to vector<16x2xf32>
    %117 = arith.mulf %102, %116 : vector<16x2xf32>
    %cst_41 = arith.constant dense<0.000000e+00> : vector<16xf32>
    %118 = vector.multi_reduction <add>, %117, %cst_41 [1] : vector<16x2xf32> to vector<16xf32>
    %119 = vector.shape_cast %118 : vector<16xf32> to vector<16x1xf32>
    %c1_i32 = arith.constant 1 : i32
    %120 = vector.broadcast %c1_i32 : i32 to vector<16x2xi32>
    %121 = arith.cmpi eq, %112, %120 : vector<16x2xi32>
    %122 = arith.extui %121 : vector<16x2xi1> to vector<16x2xi32>
    %123 = arith.sitofp %122 : vector<16x2xi32> to vector<16x2xf32>
    %124 = arith.mulf %102, %123 : vector<16x2xf32>
    %cst_42 = arith.constant dense<0.000000e+00> : vector<16xf32>
    %125 = vector.multi_reduction <add>, %124, %cst_42 [1] : vector<16x2xf32> to vector<16xf32>
    %126 = vector.shape_cast %125 : vector<16xf32> to vector<16x1xf32>
    %127 = arith.subf %111, %119 : vector<16x1xf32>
    %128 = arith.mulf %127, %43 : vector<16x1xf32>
    %129 = vector.shape_cast %128 : vector<16x1xf32> to vector<1x16x1xf32>
    %cst_43 = arith.constant dense<0.000000e+00> : vector<1xf32>
    %130 = vector.multi_reduction <add>, %129, %cst_43 [1, 2] : vector<1x16x1xf32> to vector<1xf32>
    %131 = vector.shape_cast %130 : vector<1xf32> to vector<1x1x1xf32>
    %132 = vector.extract %131[0, 0, 0] : f32 from vector<1x1x1xf32>
    %133 = arith.subf %111, %126 : vector<16x1xf32>
    %134 = arith.mulf %133, %97 : vector<16x1xf32>
    %135 = vector.shape_cast %134 : vector<16x1xf32> to vector<1x16x1xf32>
    %cst_44 = arith.constant dense<0.000000e+00> : vector<1xf32>
    %136 = vector.multi_reduction <add>, %135, %cst_44 [1, 2] : vector<1x16x1xf32> to vector<1xf32>
    %137 = vector.shape_cast %136 : vector<1xf32> to vector<1x1x1xf32>
    %138 = vector.extract %137[0, 0, 0] : f32 from vector<1x1x1xf32>
    %139 = arith.addf %132, %138 : f32
    %cst_45 = arith.constant 0.0769230798 : f32
    %140 = arith.mulf %139, %cst_45 : f32
    %141 = arith.mulf %14, %14 : vector<16x32xf32>
    %cst_46 = arith.constant dense<0.000000e+00> : vector<16xf32>
    %142 = vector.multi_reduction <add>, %141, %cst_46 [1] : vector<16x32xf32> to vector<16xf32>
    %143 = vector.shape_cast %142 : vector<16xf32> to vector<16x1xf32>
    %cst_47 = arith.constant 1.000000e-24 : f32
    %144 = vector.broadcast %cst_47 : f32 to vector<16x1xf32>
    %145 = arith.maximumf %143, %144 : vector<16x1xf32>
    %146 = math.rsqrt %145 : vector<16x1xf32>
    %147 = vector.broadcast %146 : vector<16x1xf32> to vector<16x32xf32>
    %148 = arith.mulf %14, %147 : vector<16x32xf32>
    %cst_48 = arith.constant dense<0.000000e+00> : vector<16x16xf32>
    %149 = tpu.matmul %148, %148, %cst_48 {dimension_numbers = #tpu.dot_dimension_numbers<[1], [1], [0], [0], [0, 0, 1, 0], [], []>} : vector<16x32xf32>, vector<16x32xf32>, vector<16x16xf32> -> vector<16x16xf32>
    %cst_49 = arith.constant 14.2857141 : f32
    %150 = vector.broadcast %cst_49 : f32 to vector<16x16xf32>
    %151 = arith.mulf %149, %150 : vector<16x16xf32>
    %cst_50 = arith.constant 1.000000e+00 : f32
    %152 = vector.broadcast %cst_50 : f32 to vector<16x16xf32>
    %153 = arith.subf %152, %72 : vector<16x16xf32>
    %c0_51 = arith.constant 0 : index
    %c0_52 = arith.constant 0 : index
    %154 = vector.load %arg1[%c0_51, %c0_52] : memref<16x1xi32, #tpu.memory_space<vmem>>, vector<16x1xi32>
    %c0_53 = arith.constant 0 : index
    %c0_54 = arith.constant 0 : index
    %155 = vector.load %arg2[%c0_53, %c0_54] : memref<1x16xi32, #tpu.memory_space<vmem>>, vector<1x16xi32>
    %156 = vector.broadcast %154 : vector<16x1xi32> to vector<16x16xi32>
    %157 = vector.broadcast %155 : vector<1x16xi32> to vector<16x16xi32>
    %158 = arith.cmpi eq, %156, %157 : vector<16x16xi32>
    %159 = arith.extui %158 : vector<16x16xi1> to vector<16x16xi32>
    %160 = arith.sitofp %159 : vector<16x16xi32> to vector<16x16xf32>
    %161 = arith.mulf %160, %153 : vector<16x16xf32>
    %cst_55 = arith.constant dense<0xFF800000> : vector<16xf32>
    %162 = vector.multi_reduction <maximumf>, %151, %cst_55 [1] : vector<16x16xf32> to vector<16xf32>
    %163 = vector.shape_cast %162 : vector<16xf32> to vector<16x1xf32>
    %164 = vector.broadcast %163 : vector<16x1xf32> to vector<16x16xf32>
    %165 = arith.subf %151, %164 : vector<16x16xf32>
    %166 = math.exp %165 : vector<16x16xf32>
    %167 = arith.mulf %166, %153 : vector<16x16xf32>
    %cst_56 = arith.constant dense<0.000000e+00> : vector<16xf32>
    %168 = vector.multi_reduction <add>, %167, %cst_56 [1] : vector<16x16xf32> to vector<16xf32>
    %169 = vector.shape_cast %168 : vector<16xf32> to vector<16x1xf32>
    %170 = math.log %169 : vector<16x1xf32>
    %171 = vector.broadcast %170 : vector<16x1xf32> to vector<16x16xf32>
    %172 = arith.subf %165, %171 : vector<16x16xf32>
    %cst_57 = arith.constant dense<0.000000e+00> : vector<16xf32>
    %173 = vector.multi_reduction <add>, %161, %cst_57 [1] : vector<16x16xf32> to vector<16xf32>
    %174 = vector.shape_cast %173 : vector<16xf32> to vector<16x1xf32>
    %175 = arith.mulf %161, %172 : vector<16x16xf32>
    %cst_58 = arith.constant dense<0.000000e+00> : vector<16xf32>
    %176 = vector.multi_reduction <add>, %175, %cst_58 [1] : vector<16x16xf32> to vector<16xf32>
    %177 = vector.shape_cast %176 : vector<16xf32> to vector<16x1xf32>
    %cst_59 = arith.constant 1.000000e+00 : f32
    %178 = vector.broadcast %cst_59 : f32 to vector<16x1xf32>
    %179 = arith.maximumf %174, %178 : vector<16x1xf32>
    %180 = arith.divf %177, %179 : vector<16x1xf32>
    %cst_60 = arith.constant 0.000000e+00 : f32
    %181 = vector.broadcast %cst_60 : f32 to vector<16x1xf32>
    %182 = arith.subf %181, %180 : vector<16x1xf32>
    %183 = vector.shape_cast %182 : vector<16x1xf32> to vector<1x16x1xf32>
    %cst_61 = arith.constant dense<0.000000e+00> : vector<1xf32>
    %184 = vector.multi_reduction <add>, %183, %cst_61 [1, 2] : vector<1x16x1xf32> to vector<1xf32>
    %185 = vector.shape_cast %184 : vector<1xf32> to vector<1x1x1xf32>
    %186 = vector.extract %185[0, 0, 0] : f32 from vector<1x1x1xf32>
    %cst_62 = arith.constant 1.600000e+01 : f32
    %187 = arith.divf %186, %cst_62 : f32
    %188 = arith.addf %140, %187 : f32
    %cst_63 = arith.constant 1.000000e+00 : f32
    %189 = arith.mulf %188, %cst_63 : f32
    %190 = arith.addf %58, %189 : f32
    %191 = vector.broadcast %190 : f32 to vector<1x1xf32>
    %c0_64 = arith.constant 0 : index
    %c0_65 = arith.constant 0 : index
    %192 = vector.load %arg11[%c0_64, %c0_65] : memref<1x1xf32, #tpu.memory_space<vmem>>, vector<1x1xf32>
    tpu.vector_store %arg11[%c0_64, %c0_65], %191 {strides = array<i32>} : memref<1x1xf32, #tpu.memory_space<vmem>>, vector<1x1xf32>,
    return
  }
}

</mosaic_0001>

<llo_original>
// kernel: safaari_forward.1
$region0: #{safaari_forward.1}
  #allocation0 [shape = 'u32[]', space=smem, size = 0x4, offset = 0x4, fixed_abs, tag = 'smem constant byte address 0x4 - core index']
  #allocation1 [shape = 'u32[144,128]{1,0:T(1,128)}', space=vmem, size = 0x12000, scoped, tag = 'internal scratch']
  %s0 = inlined_call_operand.vmem [shape: f32[16,16], index: 0, kind: input, shape index: {}]
  %s1 = inlined_call_operand.vmem [shape: s32[16,1], index: 1, kind: input, shape index: {}]
  %s2 = inlined_call_operand.vmem [shape: s32[1,16], index: 2, kind: input, shape index: {}]
  %s3 = inlined_call_operand.vmem [shape: f32[16,256], index: 3, kind: input, shape index: {}]
  %s4 = inlined_call_operand.vmem [shape: f32[1,256], index: 4, kind: input, shape index: {}]
  %s5 = inlined_call_operand.vmem [shape: f32[256,32], index: 5, kind: input, shape index: {}]
  %s6 = inlined_call_operand.vmem [shape: f32[1,32], index: 6, kind: input, shape index: {}]
  %s7 = inlined_call_operand.vmem [shape: f32[32,4], index: 7, kind: input, shape index: {}]
  %s8 = inlined_call_operand.vmem [shape: f32[1,4], index: 8, kind: input, shape index: {}]
  %s9 = inlined_call_operand.vmem [shape: f32[32,2], index: 9, kind: input, shape index: {}]
  %s10 = inlined_call_operand.vmem [shape: f32[1,2], index: 10, kind: input, shape index: {}]
  %s11 = inlined_call_operand.hbm [shape: f32[1,1], index: 11, kind: output, shape index: {}]
  %s12 = sld [smem:[#allocation0]]
  $region54: #{safaari_forward.1} parent=0
    _
  %s14 = ssub.s32 1, %s12
  %s15 = scalar_select 0, %s14, %s12
  $region1: #{safaari_forward.1} parent=0
    #allocation2 [shape = 'u8[512]{0}', space=vmem, size = 0x400, scoped, tag = 'output window, operand 0, single buffered']
    #allocation3 [shape = 's32[1]{0}', space=sflag, size = 0x4, scoped, tag = 'scoped memory for safaari_forward.1']
    %16 = vsyncpa [#allocation3], 0
    // Predicated region
    $region2: #{safaari_forward.1} parent=1 // pred_check
      _
    $region3: #{safaari_forward.1} parent=1 // pred_check_branch
      %18 = sbr.rel (0) target = $region5
    $region4: #{safaari_forward.1} parent=1 // pred_region
      _
    $region5: #{safaari_forward.1} parent=1 // pred_fallthru
      _
    // Predicated region
    $region6: #{safaari_forward.1} parent=1 // pred_check
      _
    $region7: #{safaari_forward.1} parent=1 // pred_check_branch
      %20 = sbr.rel (0) target = $region9
    $region8: #{safaari_forward.1} parent=1 // pred_region
      _
    $region9: #{safaari_forward.1} parent=1 // pred_fallthru
      _
    // Predicated region
    $region10: #{safaari_forward.1} parent=1 // pred_check
      _
    $region11: #{safaari_forward.1} parent=1 // pred_check_branch
      %22 = sbr.rel (0) target = $region13
    $region12: #{safaari_forward.1} parent=1 // pred_region
      _
    $region13: #{safaari_forward.1} parent=1 // pred_fallthru
      _
    // Predicated region
    $region14: #{safaari_forward.1} parent=1 // pred_check
      _
    $region15: #{safaari_forward.1} parent=1 // pred_check_branch
      %24 = sbr.rel (0) target = $region17
    $region16: #{safaari_forward.1} parent=1 // pred_region
      _
    $region17: #{safaari_forward.1} parent=1 // pred_fallthru
      _
    // Predicated region
    $region18: #{safaari_forward.1} parent=1 // pred_check
      _
    $region19: #{safaari_forward.1} parent=1 // pred_check_branch
      %26 = sbr.rel (0) target = $region21
    $region20: #{safaari_forward.1} parent=1 // pred_region
      _
    $region21: #{safaari_forward.1} parent=1 // pred_fallthru
      _
    // Predicated region
    $region22: #{safaari_forward.1} parent=1 // pred_check
      _
    $region23: #{safaari_forward.1} parent=1 // pred_check_branch
      %28 = sbr.rel (0) target = $region25
    $region24: #{safaari_forward.1} parent=1 // pred_region
      _
    $region25: #{safaari_forward.1} parent=1 // pred_fallthru
      _
    // Predicated region
    $region26: #{safaari_forward.1} parent=1 // pred_check
      _
    $region27: #{safaari_forward.1} parent=1 // pred_check_branch
      %30 = sbr.rel (0) target = $region29
    $region28: #{safaari_forward.1} parent=1 // pred_region
      _
    $region29: #{safaari_forward.1} parent=1 // pred_fallthru
      _
    // Predicated region
    $region30: #{safaari_forward.1} parent=1 // pred_check
      _
    $region31: #{safaari_forward.1} parent=1 // pred_check_branch
      %32 = sbr.rel (0) target = $region33
    $region32: #{safaari_forward.1} parent=1 // pred_region
      _
    $region33: #{safaari_forward.1} parent=1 // pred_fallthru
      _
    // Predicated region
    $region34: #{safaari_forward.1} parent=1 // pred_check
      _
    $region35: #{safaari_forward.1} parent=1 // pred_check_branch
      %34 = sbr.rel (0) target = $region37
    $region36: #{safaari_forward.1} parent=1 // pred_region
      _
    $region37: #{safaari_forward.1} parent=1 // pred_fallthru
      _
    // Predicated region
    $region38: #{safaari_forward.1} parent=1 // pred_check
      _
    $region39: #{safaari_forward.1} parent=1 // pred_check_branch
      %36 = sbr.rel (0) target = $region41
    $region40: #{safaari_forward.1} parent=1 // pred_region
      _
    $region41: #{safaari_forward.1} parent=1 // pred_fallthru
      _
    // Predicated region
    $region42: #{safaari_forward.1} parent=1 // pred_check
      _
    $region43: #{safaari_forward.1} parent=1 // pred_check_branch
      %38 = sbr.rel (0) target = $region45
    $region44: #{safaari_forward.1} parent=1 // pred_region
      _
    $region45: #{safaari_forward.1} parent=1 // pred_fallthru
      _
    %v39 = vld [vmem:[%s0] sm:$0xff]
    %v40 = vld [vmem:[%s0 + $0x8] sm:$0xff]
    %v41 = vld [vmem:[%s3] sm:$0xff]
    %v42 = vld [vmem:[%s3 + $0x8] sm:$0xff]
    %v43 = vld [vmem:[%s3 + $0x10] sm:$0xff]
    %v44 = vld [vmem:[%s3 + $0x18] sm:$0xff]
    %v45 = vld [vmem:[%s4] sm:$0x3]
    %v47 = vlaneseq
    %v48 = vshrl.u32 %v47, 7
    %v49 = vsub.s32 0, %v48
    %v50 = vrot.slane %v45, %v49
    %v51 = vlaneseq
    %v52 = vshrl.u32 %v51, 7
    %v53 = vsub.s32 1, %v52
    %v54 = vrot.slane %v45, %v53
    %vm57 = vcmask 130048
    %v59 = vsel %vm57, %v39, 0
    %v62 = vsel %vm57, %v40, 0
    %64 = vmatprep.subr.mxu0 %v42
    %65 = vmatpush1.msra.mxu0 %v41
    %66 = vmatprep.subr.mxu0 %v44
    %67 = vmatpush1.msra.mxu0 %v43
    %68 = vmatprep.subr.mxu0 0.0
    %69 = vmatpush1.msra.mxu0 0.0
    %70 = vmatprep.subr.mxu0 0.0
    %71 = vmatpush1.msra.mxu0 0.0
    %72 = vmatprep.subr.mxu0 0.0
    %73 = vmatpush1.msra.mxu0 0.0
    %74 = vmatprep.subr.mxu0 0.0
    %75 = vmatpush1.msra.mxu0 0.0
    %76 = vmatprep.subr.mxu0 0.0
    %77 = vmatpush1.msra.mxu0 0.0
    %78 = vmatprep.subr.mxu0 0.0
    %79 = vmatpush1.msra.mxu0 0.0
    %80 = vmatprep.subr.mxu0 0.0
    %81 = vmatpush1.msra.mxu0 0.0
    %82 = vmatprep.subr.mxu0 0.0
    %83 = vmatpush1.msra.mxu0 0.0
    %84 = vmatprep.subr.mxu0 0.0
    %85 = vmatpush1.msra.mxu0 0.0
    %86 = vmatprep.subr.mxu0 0.0
    %87 = vmatpush1.msra.mxu0 0.0
    %88 = vmatprep.subr.mxu0 0.0
    %89 = vmatpush1.msra.mxu0 0.0
    %90 = vmatprep.subr.mxu0 0.0
    %91 = vmatpush1.msra.mxu0 0.0
    %92 = vmatprep.subr.mxu0 0.0
    %93 = vmatpush1.msra.mxu0 0.0
    %94 = vmatprep.subr.mxu0 0.0
    %95 = vmatpush1.msra.mxu0 0.0
    %96 = vmatprep.subr.mxu0 0.0
    %97 = vmatpush1.msra.mxu0 0.0
    %98 = vmatprep.subr.mxu0 0.0
    %99 = vmatpush1.msra.mxu0 0.0
    %100 = vmatprep.subr.mxu0 0.0
    %101 = vmatpush1.msra.mxu0 0.0
    %102 = vmatprep.subr.mxu0 0.0
    %103 = vmatpush1.msra.mxu0 0.0
    %104 = vmatprep.subr.mxu0 0.0
    %105 = vmatpush1.msra.mxu0 0.0
    %106 = vmatprep.subr.mxu0 0.0
    %107 = vmatpush1.msra.mxu0 0.0
    %108 = vmatprep.subr.mxu0 0.0
    %109 = vmatpush1.msra.mxu0 0.0
    %110 = vmatprep.subr.mxu0 0.0
    %111 = vmatpush1.msra.mxu0 0.0
    %112 = vmatprep.subr.mxu0 0.0
    %113 = vmatpush1.msra.mxu0 0.0
    %114 = vmatprep.subr.mxu0 0.0
    %115 = vmatpush1.msra.mxu0 0.0
    %116 = vmatprep.subr.mxu0 0.0
    %117 = vmatpush1.msra.mxu0 0.0
    %118 = vmatprep.subr.mxu0 0.0
    %119 = vmatpush1.msra.mxu0 0.0
    %120 = vmatprep.subr.mxu0 0.0
    %121 = vmatpush1.msra.mxu0 0.0
    %122 = vmatprep.subr.mxu0 0.0
    %123 = vmatpush1.msra.mxu0 0.0
    %124 = vmatprep.subr.mxu0 0.0
    %125 = vmatpush1.msra.mxu0 0.0
    %126 = vmatprep.subr.mxu0 0.0
    %127 = vmatpush1.msra.mxu0 0.0
    %128 = vmatprep.mubr.f32.mxu0 0.0
    %129 = vmatmul.mubr.f32.gmra.mrb[0].mxu0 %v59
    %v130 = vpop.f32.mrb[0].mxu0
    %v131 = vadd.f32 %v50, %v130
    %v132 = vpop.f32.mrb[0].mxu0
    %v133 = vadd.f32 %v54, %v132
    %134 = vmatprep.mubr.f32.mxu0 0.0
    %135 = vmatmul.mubr.f32.gmra.mrb[0].mxu0 %v62
    %v136 = vpop.f32.mrb[0].mxu0
    %v137 = vadd.f32 %v50, %v136
    %v138 = vpop.f32.mrb[0].mxu0
    %v139 = vadd.f32 %v54, %v138
    %140 = vdwg.mxu0
    %v141 = vmax.f32 %v131, 0.0
    %v142 = vmax.f32 %v133, 0.0
    %v143 = vmax.f32 %v137, 0.0
    %v144 = vmax.f32 %v139, 0.0
    %v145 = vld [vmem:[%s5] sm:$0xff]
    %v146 = vld [vmem:[%s5 + $0x8] sm:$0xff]
    %v147 = vld [vmem:[%s5 + $0x10] sm:$0xff]
    %v148 = vld [vmem:[%s5 + $0x18] sm:$0xff]
    %v149 = vld [vmem:[%s5 + $0x20] sm:$0xff]
    %v150 = vld [vmem:[%s5 + $0x28] sm:$0xff]
    %v151 = vld [vmem:[%s5 + $0x30] sm:$0xff]
    %v152 = vld [vmem:[%s5 + $0x38] sm:$0xff]
    %v153 = vld [vmem:[%s5 + $0x40] sm:$0xff]
    %v154 = vld [vmem:[%s5 + $0x48] sm:$0xff]
    %v155 = vld [vmem:[%s5 + $0x50] sm:$0xff]
    %v156 = vld [vmem:[%s5 + $0x58] sm:$0xff]
    %v157 = vld [vmem:[%s5 + $0x60] sm:$0xff]
    %v158 = vld [vmem:[%s5 + $0x68] sm:$0xff]
    %v159 = vld [vmem:[%s5 + $0x70] sm:$0xff]
    %v160 = vld [vmem:[%s5 + $0x78] sm:$0xff]
    %v161 = vld [vmem:[%s5 + $0x80] sm:$0xff]
    %v162 = vld [vmem:[%s5 + $0x88] sm:$0xff]
    %v163 = vld [vmem:[%s5 + $0x90] sm:$0xff]
    %v164 = vld [vmem:[%s5 + $0x98] sm:$0xff]
    %v165 = vld [vmem:[%s5 + $0xa0] sm:$0xff]
    %v166 = vld [vmem:[%s5 + $0xa8] sm:$0xff]
    %v167 = vld [vmem:[%s5 + $0xb0] sm:$0xff]
    %v168 = vld [vmem:[%s5 + $0xb8] sm:$0xff]
    %v169 = vld [vmem:[%s5 + $0xc0] sm:$0xff]
    %v170 = vld [vmem:[%s5 + $0xc8] sm:$0xff]
    %v171 = vld [vmem:[%s5 + $0xd0] sm:$0xff]
    %v172 = vld [vmem:[%s5 + $0xd8] sm:$0xff]
    %v173 = vld [vmem:[%s5 + $0xe0] sm:$0xff]
    %v174 = vld [vmem:[%s5 + $0xe8] sm:$0xff]
    %v175 = vld [vmem:[%s5 + $0xf0] sm:$0xff]
    %v176 = vld [vmem:[%s5 + $0xf8] sm:$0xff]
    %v177 = vld [vmem:[%s6] sm:$0x1]
    %v179 = vlaneseq
    %v180 = vshrl.u32 %v179, 7
    %v181 = vsub.s32 0, %v180
    %v182 = vrot.slane %v177, %v181
    %184 = vmatprep.subr.mxu0 0.0
    %185 = vmatpush1.msra.mxu0 %v145
    %186 = vmatprep.subr.mxu0 0.0
    %187 = vmatpush1.msra.mxu0 %v146
    %188 = vmatprep.subr.mxu0 0.0
    %189 = vmatpush1.msra.mxu0 %v147
    %190 = vmatprep.subr.mxu0 0.0
    %191 = vmatpush1.msra.mxu0 %v148
    %192 = vmatprep.subr.mxu0 0.0
    %193 = vmatpush1.msra.mxu0 %v149
    %194 = vmatprep.subr.mxu0 0.0
    %195 = vmatpush1.msra.mxu0 %v150
    %196 = vmatprep.subr.mxu0 0.0
    %197 = vmatpush1.msra.mxu0 %v151
    %198 = vmatprep.subr.mxu0 0.0
    %199 = vmatpush1.msra.mxu0 %v152
    %200 = vmatprep.subr.mxu0 0.0
    %201 = vmatpush1.msra.mxu0 %v153
    %202 = vmatprep.subr.mxu0 0.0
    %203 = vmatpush1.msra.mxu0 %v154
    %204 = vmatprep.subr.mxu0 0.0
    %205 = vmatpush1.msra.mxu0 %v155
    %206 = vmatprep.subr.mxu0 0.0
    %207 = vmatpush1.msra.mxu0 %v156
    %208 = vmatprep.subr.mxu0 0.0
    %209 = vmatpush1.msra.mxu0 %v157
    %210 = vmatprep.subr.mxu0 0.0
    %211 = vmatpush1.msra.mxu0 %v158
    %212 = vmatprep.subr.mxu0 0.0
    %213 = vmatpush1.msra.mxu0 %v159
    %214 = vmatprep.subr.mxu0 0.0
    %215 = vmatpush1.msra.mxu0 %v160
    %216 = vmatprep.subr.mxu0 0.0
    %217 = vmatpush1.msra.mxu0 %v161
    %218 = vmatprep.subr.mxu0 0.0
    %219 = vmatpush1.msra.mxu0 %v162
    %220 = vmatprep.subr.mxu0 0.0
    %221 = vmatpush1.msra.mxu0 %v163
    %222 = vmatprep.subr.mxu0 0.0
    %223 = vmatpush1.msra.mxu0 %v164
    %224 = vmatprep.subr.mxu0 0.0
    %225 = vmatpush1.msra.mxu0 %v165
    %226 = vmatprep.subr.mxu0 0.0
    %227 = vmatpush1.msra.mxu0 %v166
    %228 = vmatprep.subr.mxu0 0.0
    %229 = vmatpush1.msra.mxu0 %v167
    %230 = vmatprep.subr.mxu0 0.0
    %231 = vmatpush1.msra.mxu0 %v168
    %232 = vmatprep.subr.mxu0 0.0
    %233 = vmatpush1.msra.mxu0 %v169
    %234 = vmatprep.subr.mxu0 0.0
    %235 = vmatpush1.msra.mxu0 %v170
    %236 = vmatprep.subr.mxu0 0.0
    %237 = vmatpush1.msra.mxu0 %v171
    %238 = vmatprep.subr.mxu0 0.0
    %239 = vmatpush1.msra.mxu0 %v172
    %240 = vmatprep.subr.mxu0 0.0
    %241 = vmatpush1.msra.mxu0 %v173
    %242 = vmatprep.subr.mxu0 0.0
    %243 = vmatpush1.msra.mxu0 %v174
    %244 = vmatprep.subr.mxu0 0.0
    %245 = vmatpush1.msra.mxu0 %v175
    %246 = vmatprep.subr.mxu0 0.0
    %247 = vmatpush1.msra.mxu0 %v176
    %248 = vmatprep.mubr.f32.mxu0 %v142
    %249 = vmatmul.mubr.f32.gmra.mrb[0].mxu0 %v141
    %v250 = vpop.f32.mrb[0].mxu0
    %v251 = vadd.f32 %v182, %v250
    %v252 = vpop.f32.mrb[0].mxu0
    %253 = vmatprep.mubr.f32.mxu0 %v144
    %254 = vmatmul.mubr.f32.gmra.mrb[0].mxu0 %v143
    %v255 = vpop.f32.mrb[0].mxu0
    %v256 = vadd.f32 %v182, %v255
    %v257 = vpop.f32.mrb[0].mxu0
    %258 = vdwg.mxu0
    %v259 = vmax.f32 %v251, 0.0
    %v260 = vmax.f32 %v256, 0.0
    %v261 = vld [vmem:[%s7] sm:$0xff]
    %v262 = vld [vmem:[%s7 + $0x8] sm:$0xff]
    %v263 = vld [vmem:[%s7 + $0x10] sm:$0xff]
    %v264 = vld [vmem:[%s7 + $0x18] sm:$0xff]
    %v265 = vld [vmem:[%s8] sm:$0x1]
    %v267 = vlaneseq
    %v268 = vshrl.u32 %v267, 7
    %v269 = vsub.s32 0, %v268
    %v270 = vrot.slane %v265, %v269
    %vm272 = vcmask 261120
    %v274 = vsel %vm272, %v259, 0
    %v277 = vsel %vm272, %v260, 0
    %279 = vmatprep.subr.mxu0 0.0
    %280 = vmatpush1.msra.mxu0 %v261
    %281 = vmatprep.subr.mxu0 0.0
    %282 = vmatpush1.msra.mxu0 %v262
    %283 = vmatprep.subr.mxu0 0.0
    %284 = vmatpush1.msra.mxu0 %v263
    %285 = vmatprep.subr.mxu0 0.0
    %286 = vmatpush1.msra.mxu0 %v264
    %287 = vmatprep.subr.mxu0 0.0
    %288 = vmatpush1.msra.mxu0 0.0
    %289 = vmatprep.subr.mxu0 0.0
    %290 = vmatpush1.msra.mxu0 0.0
    %291 = vmatprep.subr.mxu0 0.0
    %292 = vmatpush1.msra.mxu0 0.0
    %293 = vmatprep.subr.mxu0 0.0
    %294 = vmatpush1.msra.mxu0 0.0
    %295 = vmatprep.subr.mxu0 0.0
    %296 = vmatpush1.msra.mxu0 0.0
    %297 = vmatprep.subr.mxu0 0.0
    %298 = vmatpush1.msra.mxu0 0.0
    %299 = vmatprep.subr.mxu0 0.0
    %300 = vmatpush1.msra.mxu0 0.0
    %301 = vmatprep.subr.mxu0 0.0
    %302 = vmatpush1.msra.mxu0 0.0
    %303 = vmatprep.subr.mxu0 0.0
    %304 = vmatpush1.msra.mxu0 0.0
    %305 = vmatprep.subr.mxu0 0.0
    %306 = vmatpush1.msra.mxu0 0.0
    %307 = vmatprep.subr.mxu0 0.0
    %308 = vmatpush1.msra.mxu0 0.0
    %309 = vmatprep.subr.mxu0 0.0
    %310 = vmatpush1.msra.mxu0 0.0
    %311 = vmatprep.subr.mxu0 0.0
    %312 = vmatpush1.msra.mxu0 0.0
    %313 = vmatprep.subr.mxu0 0.0
    %314 = vmatpush1.msra.mxu0 0.0
    %315 = vmatprep.subr.mxu0 0.0
    %316 = vmatpush1.msra.mxu0 0.0
    %317 = vmatprep.subr.mxu0 0.0
    %318 = vmatpush1.msra.mxu0 0.0
    %319 = vmatprep.subr.mxu0 0.0
    %320 = vmatpush1.msra.mxu0 0.0
    %321 = vmatprep.subr.mxu0 0.0
    %322 = vmatpush1.msra.mxu0 0.0
    %323 = vmatprep.subr.mxu0 0.0
    %324 = vmatpush1.msra.mxu0 0.0
    %325 = vmatprep.subr.mxu0 0.0
    %326 = vmatpush1.msra.mxu0 0.0
    %327 = vmatprep.subr.mxu0 0.0
    %328 = vmatpush1.msra.mxu0 0.0
    %329 = vmatprep.subr.mxu0 0.0
    %330 = vmatpush1.msra.mxu0 0.0
    %331 = vmatprep.subr.mxu0 0.0
    %332 = vmatpush1.msra.mxu0 0.0
    %333 = vmatprep.subr.mxu0 0.0
    %334 = vmatpush1.msra.mxu0 0.0
    %335 = vmatprep.subr.mxu0 0.0
    %336 = vmatpush1.msra.mxu0 0.0
    %337 = vmatprep.subr.mxu0 0.0
    %338 = vmatpush1.msra.mxu0 0.0
    %339 = vmatprep.subr.mxu0 0.0
    %340 = vmatpush1.msra.mxu0 0.0
    %341 = vmatprep.subr.mxu0 0.0
    %342 = vmatpush1.msra.mxu0 0.0
    %343 = vmatprep.mubr.f32.mxu0 0.0
    %344 = vmatmul.mubr.f32.gmra.mrb[0].mxu0 %v274
    %v345 = vpop.f32.mrb[0].mxu0
    %v346 = vadd.f32 %v270, %v345
    %v347 = vpop.f32.mrb[0].mxu0
    %348 = vmatprep.mubr.f32.mxu0 0.0
    %349 = vmatmul.mubr.f32.gmra.mrb[0].mxu0 %v277
    %v350 = vpop.f32.mrb[0].mxu0
    %v351 = vadd.f32 %v270, %v350
    %v352 = vpop.f32.mrb[0].mxu0
    %353 = vdwg.mxu0
    %vm354 = vcmask 31744
    %v355 = vsel %vm354, %v346, -inf
    %356 = vmax.xlane.f32.xlu0 %v355
    %v357 = vpop.xlane.xlu0 %356
    %v358 = vsel %vm354, %v351, -inf
    %359 = vmax.xlane.f32.xlu0 %v358
    %v360 = vpop.xlane.xlu0 %359
    %v361 = vsub.f32 %v346, %v357
    %v362 = vsub.f32 %v351, %v360
    %v363 = vmul.f32 %v361, 1.442695
    %v364 = vpow.pop %v363
    %v365 = vmul.f32 %v362, 1.442695
    %v366 = vpow.pop %v365
    %v367 = vsel %vm354, %v364, 0.0
    %368 = vadd.xlane.f32.xlu0 %v367
    %v369 = vpop.xlane.xlu0 %368
    %v370 = vsel %vm354, %v366, 0.0
    %371 = vadd.xlane.f32.xlu0 %v370
    %v372 = vpop.xlane.xlu0 %371
    %v373 = vlog2.pop %v369
    %v374 = vmul.f32 %v373, 0.6931472
    %v375 = vlog2.pop %v372
    %v376 = vmul.f32 %v375, 0.6931472
    %v377 = vadd.f32 %v357, %v374
    %v378 = vadd.f32 %v360, %v376
    %v379 = vlaneseq
    %v380 = vand.u32 %v379, 127
    %v381 = vld [vmem:[%s1] sm:$0xff]
    %v382 = vld [vmem:[%s1 + $0x8] sm:$0xff]
    %383 = vset.pattern.permute.xlu0 0
    %384 = vperm.xlu0 %383, %v381
    %v385 = vpop.permute.xlu0 %384
    %386 = vset.pattern.permute.xlu0 0
    %387 = vperm.xlu0 %386, %v382
    %v388 = vpop.permute.xlu0 %387
    %vm389 = vcmp.eq.s32.totalorder %v385, %v380
    %vm390 = vcmp.eq.s32.totalorder %v388, %v380
    %v391 = vsel %vm389, 1, 0
    %v392 = vsel %vm390, 1, 0
    %v393 = vcvt.s32.f32 %v391
    %v394 = vcvt.s32.f32 %v392
    %v395 = vmul.f32 %v393, %v346
    %v396 = vmul.f32 %v394, %v351
    %v397 = vsel %vm354, %v395, 0.0
    %398 = vadd.xlane.f32.xlu0 %v397
    %v399 = vpop.xlane.xlu0 %398
    %v400 = vsel %vm354, %v396, 0.0
    %401 = vadd.xlane.f32.xlu0 %v400
    %v402 = vpop.xlane.xlu0 %401
    %v403 = vsub.f32 %v377, %v399
    %v404 = vsub.f32 %v378, %v402
    %v405 = vlaneseq
    %v406 = vshrl.u32 %v405, 7
    %v407 = vadd.s32 %v406, 8
    %vm408 = vcmp.lt.s32.totalorder %v406, 8
    %vm409 = vcmp.lt.s32.totalorder %v407, 8
    %v410 = vsel %vm408, 1, 0
    %v411 = vsel %vm409, 1, 0
    %v412 = vcvt.s32.f32 %v410
    %v413 = vcvt.s32.f32 %v411
    %v414 = vsub.f32 1.0, %v412
    %v415 = vsub.f32 1.0, %v413
    %v416 = vmul.f32 %v403, %v412
    %v417 = vmul.f32 %v404, %v413
    %vm418 = vcmask 7168
    %v419 = vsel %vm418, %v416, 0.0
    %v420 = vsel %vm418, %v417, 0.0
    %v421 = vadd.f32 %v419, %v420
    %422 = vadd.xlane.f32.xlu0 %v421
    %v423 = vpop.xlane.xlu0 %422
    %v424 = vrot.slane %v423, 4
    %v425 = vadd.f32 %v423, %v424
    %v426 = vrot.slane %v425, 2
    %v427 = vadd.f32 %v425, %v426
    %v428 = vrot.slane %v427, 1
    %v429 = vadd.f32 %v427, %v428
    %s430 = vtos %v429
    %s431 = smul.f32 %s430, 0.125
    %v432 = vmul.f32 %v403, %v414
    %v433 = vmul.f32 %v404, %v415
    %v434 = vsel %vm418, %v432, 0.0
    %v435 = vsel %vm418, %v433, 0.0
    %v436 = vadd.f32 %v434, %v435
    %437 = vadd.xlane.f32.xlu0 %v436
    %v438 = vpop.xlane.xlu0 %437
    %v439 = vrot.slane %v438, 4
    %v440 = vadd.f32 %v438, %v439
    %v441 = vrot.slane %v440, 2
    %v442 = vadd.f32 %v440, %v441
    %v443 = vrot.slane %v442, 1
    %v444 = vadd.f32 %v442, %v443
    %s445 = vtos %v444
    %s446 = smul.f32 %s445, 0.125
    %s447 = sadd.f32 %s431, %s446
    %v448 = vrcp.pop %v369
    %v449 = vmul.f32 %v364, %v448
    %v450 = vrcp.pop %v372
    %v451 = vmul.f32 %v366, %v450
    %vm452 = vcmp.lt.s32.totalorder %v380, 3
    %v453 = vsel %vm452, 1, 0
    %v454 = vcvt.s32.f32 %v453
    %v455 = vmul.f32 %v449, %v454
    %v456 = vmul.f32 %v451, %v454
    %v457 = vsel %vm354, %v455, 0.0
    %458 = vadd.xlane.f32.xlu0 %v457
    %v459 = vpop.xlane.xlu0 %458
    %v460 = vsel %vm354, %v456, 0.0
    %461 = vadd.xlane.f32.xlu0 %v460
    %v462 = vpop.xlane.xlu0 %461
    %vm463 = vcmp.eq.s32.totalorder %v406, %v380
    %vm464 = vcmp.eq.s32.totalorder %v407, %v380
    %v465 = vsel %vm463, 1, 0
    %v466 = vsel %vm464, 1, 0
    %v467 = vcvt.s32.f32 %v465
    %v468 = vcvt.s32.f32 %v466
    %v469 = vmul.f32 %v459, %v467
    %v470 = vmul.f32 %v462, %v468
    %v472 = vsel %vm57, 1.0, 0
    %474 = vmatprep.subr.mxu0 0.0
    %475 = vmatpush1.msra.mxu0 %v469
    %476 = vmatprep.subr.mxu0 0.0
    %477 = vmatpush1.msra.mxu0 %v470
    %478 = vmatprep.subr.mxu0 0.0
    %479 = vmatpush1.msra.mxu0 0.0
    %480 = vmatprep.subr.mxu0 0.0
    %481 = vmatpush1.msra.mxu0 0.0
    %482 = vmatprep.subr.mxu0 0.0
    %483 = vmatpush1.msra.mxu0 0.0
    %484 = vmatprep.subr.mxu0 0.0
    %485 = vmatpush1.msra.mxu0 0.0
    %486 = vmatprep.subr.mxu0 0.0
    %487 = vmatpush1.msra.mxu0 0.0
    %488 = vmatprep.subr.mxu0 0.0
    %489 = vmatpush1.msra.mxu0 0.0
    %490 = vmatprep.subr.mxu0 0.0
    %491 = vmatpush1.msra.mxu0 0.0
    %492 = vmatprep.subr.mxu0 0.0
    %493 = vmatpush1.msra.mxu0 0.0
    %494 = vmatprep.subr.mxu0 0.0
    %495 = vmatpush1.msra.mxu0 0.0
    %496 = vmatprep.subr.mxu0 0.0
    %497 = vmatpush1.msra.mxu0 0.0
    %498 = vmatprep.subr.mxu0 0.0
    %499 = vmatpush1.msra.mxu0 0.0
    %500 = vmatprep.subr.mxu0 0.0
    %501 = vmatpush1.msra.mxu0 0.0
    %502 = vmatprep.subr.mxu0 0.0
    %503 = vmatpush1.msra.mxu0 0.0
    %504 = vmatprep.subr.mxu0 0.0
    %505 = vmatpush1.msra.mxu0 0.0
    %506 = vmatprep.subr.mxu0 0.0
    %507 = vmatpush1.msra.mxu0 0.0
    %508 = vmatprep.subr.mxu0 0.0
    %509 = vmatpush1.msra.mxu0 0.0
    %510 = vmatprep.subr.mxu0 0.0
    %511 = vmatpush1.msra.mxu0 0.0
    %512 = vmatprep.subr.mxu0 0.0
    %513 = vmatpush1.msra.mxu0 0.0
    %514 = vmatprep.subr.mxu0 0.0
    %515 = vmatpush1.msra.mxu0 0.0
    %516 = vmatprep.subr.mxu0 0.0
    %517 = vmatpush1.msra.mxu0 0.0
    %518 = vmatprep.subr.mxu0 0.0
    %519 = vmatpush1.msra.mxu0 0.0
    %520 = vmatprep.subr.mxu0 0.0
    %521 = vmatpush1.msra.mxu0 0.0
    %522 = vmatprep.subr.mxu0 0.0
    %523 = vmatpush1.msra.mxu0 0.0
    %524 = vmatprep.subr.mxu0 0.0
    %525 = vmatpush1.msra.mxu0 0.0
    %526 = vmatprep.subr.mxu0 0.0
    %527 = vmatpush1.msra.mxu0 0.0
    %528 = vmatprep.subr.mxu0 0.0
    %529 = vmatpush1.msra.mxu0 0.0
    %530 = vmatprep.subr.mxu0 0.0
    %531 = vmatpush1.msra.mxu0 0.0
    %532 = vmatprep.subr.mxu0 0.0
    %533 = vmatpush1.msra.mxu0 0.0
    %534 = vmatprep.subr.mxu0 0.0
    %535 = vmatpush1.msra.mxu0 0.0
    %536 = vmatprep.subr.mxu0 0.0
    %537 = vmatpush1.msra.mxu0 0.0
    %538 = vmatprep.mubr.f32.mxu0 0.0
    %539 = vmatmul.mubr.f32.gmra.mrb[0].mxu0 %v472
    %v540 = vpop.f32.mrb[0].mxu0
    %v541 = vadd.f32 0.0, %v540
    %v542 = vpop.f32.mrb[0].mxu0
    %543 = vmatprep.mubr.f32.mxu0 0.0
    %544 = vmatmul.mubr.f32.gmra.mrb[0].mxu0 %v472
    %v545 = vpop.f32.mrb[0].mxu0
    %v546 = vadd.f32 0.0, %v545
    %v547 = vpop.f32.mrb[0].mxu0
    %548 = vdwg.mxu0
    %vm549 = vcmp.gt.f32.partialorder %v541, %v459
    %vm550 = vcmp.gt.f32.partialorder %v546, %v462
    %vm551 = vcmp.eq.f32.partialorder %v541, %v459
    %vm552 = vcmp.eq.f32.partialorder %v546, %v462
    %vm553 = vcmp.lt.s32.totalorder %v380, %v406
    %vm554 = vcmp.lt.s32.totalorder %v380, %v407
    %vm555 = vmand %vm551, %vm553
    %vm556 = vmand %vm552, %vm554
    %vm557 = vcmp.ge.s32.totalorder %v380, 8
    %vm558 = vmor %vm549, %vm555
    %vm559 = vmor %vm550, %vm556
    %vm560 = vmand %vm557, %vm558
    %vm561 = vmand %vm557, %vm559
    %v562 = vsel %vm560, 1, 0
    %v563 = vsel %vm561, 1, 0
    %v564 = vcvt.s32.f32 %v562
    %v565 = vcvt.s32.f32 %v563
    %v566 = vsel %vm57, %v564, 0.0
    %567 = vadd.xlane.f32.xlu0 %v566
    %v568 = vpop.xlane.xlu0 %567
    %v569 = vsel %vm57, %v565, 0.0
    %570 = vadd.xlane.f32.xlu0 %v569
    %v571 = vpop.xlane.xlu0 %570
    %vm572 = vcmp.ge.s32.totalorder %v406, 8
    %vm573 = vcmp.ge.s32.totalorder %v407, 8
    %vm574 = vcmp.lt.f32.partialorder %v568, 5.0
    %vm575 = vcmp.lt.f32.partialorder %v571, 5.0
    %vm576 = vmand %vm572, %vm574
    %vm577 = vmand %vm573, %vm575
    %v578 = vsel %vm576, 1, 0
    %v579 = vsel %vm577, 1, 0
    %v580 = vcvt.s32.f32 %v578
    %v581 = vcvt.s32.f32 %v579
    %v582 = vld [vmem:[%s9] sm:$0xff]
    %v583 = vld [vmem:[%s9 + $0x8] sm:$0xff]
    %v584 = vld [vmem:[%s9 + $0x10] sm:$0xff]
    %v585 = vld [vmem:[%s9 + $0x18] sm:$0xff]
    %v586 = vld [vmem:[%s10] sm:$0x1]
    %v588 = vlaneseq
    %v589 = vshrl.u32 %v588, 7
    %v590 = vsub.s32 0, %v589
    %v591 = vrot.slane %v586, %v590
    %593 = vmatprep.subr.mxu0 0.0
    %594 = vmatpush1.msra.mxu0 %v582
    %595 = vmatprep.subr.mxu0 0.0
    %596 = vmatpush1.msra.mxu0 %v583
    %597 = vmatprep.subr.mxu0 0.0
    %598 = vmatpush1.msra.mxu0 %v584
    %599 = vmatprep.subr.mxu0 0.0
    %600 = vmatpush1.msra.mxu0 %v585
    %601 = vmatprep.subr.mxu0 0.0
    %602 = vmatpush1.msra.mxu0 0.0
    %603 = vmatprep.subr.mxu0 0.0
    %604 = vmatpush1.msra.mxu0 0.0
    %605 = vmatprep.subr.mxu0 0.0
    %606 = vmatpush1.msra.mxu0 0.0
    %607 = vmatprep.subr.mxu0 0.0
    %608 = vmatpush1.msra.mxu0 0.0
    %609 = vmatprep.subr.mxu0 0.0
    %610 = vmatpush1.msra.mxu0 0.0
    %611 = vmatprep.subr.mxu0 0.0
    %612 = vmatpush1.msra.mxu0 0.0
    %613 = vmatprep.subr.mxu0 0.0
    %614 = vmatpush1.msra.mxu0 0.0
    %615 = vmatprep.subr.mxu0 0.0
    %616 = vmatpush1.msra.mxu0 0.0
    %617 = vmatprep.subr.mxu0 0.0
    %618 = vmatpush1.msra.mxu0 0.0
    %619 = vmatprep.subr.mxu0 0.0
    %620 = vmatpush1.msra.mxu0 0.0
    %621 = vmatprep.subr.mxu0 0.0
    %622 = vmatpush1.msra.mxu0 0.0
    %623 = vmatprep.subr.mxu0 0.0
    %624 = vmatpush1.msra.mxu0 0.0
    %625 = vmatprep.subr.mxu0 0.0
    %626 = vmatpush1.msra.mxu0 0.0
    %627 = vmatprep.subr.mxu0 0.0
    %628 = vmatpush1.msra.mxu0 0.0
    %629 = vmatprep.subr.mxu0 0.0
    %630 = vmatpush1.msra.mxu0 0.0
    %631 = vmatprep.subr.mxu0 0.0
    %632 = vmatpush1.msra.mxu0 0.0
    %633 = vmatprep.subr.mxu0 0.0
    %634 = vmatpush1.msra.mxu0 0.0
    %635 = vmatprep.subr.mxu0 0.0
    %636 = vmatpush1.msra.mxu0 0.0
    %637 = vmatprep.subr.mxu0 0.0
    %638 = vmatpush1.msra.mxu0 0.0
    %639 = vmatprep.subr.mxu0 0.0
    %640 = vmatpush1.msra.mxu0 0.0
    %641 = vmatprep.subr.mxu0 0.0
    %642 = vmatpush1.msra.mxu0 0.0
    %643 = vmatprep.subr.mxu0 0.0
    %644 = vmatpush1.msra.mxu0 0.0
    %645 = vmatprep.subr.mxu0 0.0
    %646 = vmatpush1.msra.mxu0 0.0
    %647 = vmatprep.subr.mxu0 0.0
    %648 = vmatpush1.msra.mxu0 0.0
    %649 = vmatprep.subr.mxu0 0.0
    %650 = vmatpush1.msra.mxu0 0.0
    %651 = vmatprep.subr.mxu0 0.0
    %652 = vmatpush1.msra.mxu0 0.0
    %653 = vmatprep.subr.mxu0 0.0
    %654 = vmatpush1.msra.mxu0 0.0
    %655 = vmatprep.subr.mxu0 0.0
    %656 = vmatpush1.msra.mxu0 0.0
    %657 = vmatprep.mubr.f32.mxu0 0.0
    %658 = vmatmul.mubr.f32.gmra.mrb[0].mxu0 %v274
    %v659 = vpop.f32.mrb[0].mxu0
    %v660 = vadd.f32 %v591, %v659
    %v661 = vpop.f32.mrb[0].mxu0
    %662 = vmatprep.mubr.f32.mxu0 0.0
    %663 = vmatmul.mubr.f32.gmra.mrb[0].mxu0 %v277
    %v664 = vpop.f32.mrb[0].mxu0
    %v665 = vadd.f32 %v591, %v664
    %v666 = vpop.f32.mrb[0].mxu0
    %667 = vdwg.mxu0
    %vm668 = vcmask 15360
    %v669 = vsel %vm668, %v660, -inf
    %670 = vmax.xlane.f32.xlu0 %v669
    %v671 = vpop.xlane.xlu0 %670
    %v672 = vsel %vm668, %v665, -inf
    %673 = vmax.xlane.f32.xlu0 %v672
    %v674 = vpop.xlane.xlu0 %673
    %v675 = vsub.f32 %v660, %v671
    %v676 = vsub.f32 %v665, %v674
    %v677 = vmul.f32 %v675, 1.442695
    %v678 = vpow.pop %v677
    %v679 = vmul.f32 %v676, 1.442695
    %v680 = vpow.pop %v679
    %v681 = vsel %vm668, %v678, 0.0
    %682 = vadd.xlane.f32.xlu0 %v681
    %v683 = vpop.xlane.xlu0 %682
    %v684 = vsel %vm668, %v680, 0.0
    %685 = vadd.xlane.f32.xlu0 %v684
    %v686 = vpop.xlane.xlu0 %685
    %v687 = vlog2.pop %v683
    %v688 = vmul.f32 %v687, 0.6931472
    %v689 = vlog2.pop %v686
    %v690 = vmul.f32 %v689, 0.6931472
    %v691 = vadd.f32 %v671, %v688
    %v692 = vadd.f32 %v674, %v690
    %vm693 = vcmp.eq.s32.totalorder %v380, 0
    %v694 = vsel %vm693, 1, 0
    %v695 = vcvt.s32.f32 %v694
    %v696 = vmul.f32 %v660, %v695
    %v697 = vmul.f32 %v665, %v695
    %v698 = vsel %vm668, %v696, 0.0
    %699 = vadd.xlane.f32.xlu0 %v698
    %v700 = vpop.xlane.xlu0 %699
    %v701 = vsel %vm668, %v697, 0.0
    %702 = vadd.xlane.f32.xlu0 %v701
    %v703 = vpop.xlane.xlu0 %702
    %vm704 = vcmp.eq.s32.totalorder %v380, 1
    %v705 = vsel %vm704, 1, 0
    %v706 = vcvt.s32.f32 %v705
    %v707 = vmul.f32 %v660, %v706
    %v708 = vmul.f32 %v665, %v706
    %v709 = vsel %vm668, %v707, 0.0
    %710 = vadd.xlane.f32.xlu0 %v709
    %v711 = vpop.xlane.xlu0 %710
    %v712 = vsel %vm668, %v708, 0.0
    %713 = vadd.xlane.f32.xlu0 %v712
    %v714 = vpop.xlane.xlu0 %713
    %v715 = vsub.f32 %v691, %v700
    %v716 = vsub.f32 %v692, %v703
    %v717 = vmul.f32 %v715, %v412
    %v718 = vmul.f32 %v716, %v413
    %v719 = vsel %vm418, %v717, 0.0
    %v720 = vsel %vm418, %v718, 0.0
    %v721 = vadd.f32 %v719, %v720
    %722 = vadd.xlane.f32.xlu0 %v721
    %v723 = vpop.xlane.xlu0 %722
    %v724 = vrot.slane %v723, 4
    %v725 = vadd.f32 %v723, %v724
    %v726 = vrot.slane %v725, 2
    %v727 = vadd.f32 %v725, %v726
    %v728 = vrot.slane %v727, 1
    %v729 = vadd.f32 %v727, %v728
    %s730 = vtos %v729
    %v731 = vsub.f32 %v691, %v711
    %v732 = vsub.f32 %v692, %v714
    %v733 = vmul.f32 %v731, %v580
    %v734 = vmul.f32 %v732, %v581
    %v735 = vsel %vm418, %v733, 0.0
    %v736 = vsel %vm418, %v734, 0.0
    %v737 = vadd.f32 %v735, %v736
    %738 = vadd.xlane.f32.xlu0 %v737
    %v739 = vpop.xlane.xlu0 %738
    %v740 = vrot.slane %v739, 4
    %v741 = vadd.f32 %v739, %v740
    %v742 = vrot.slane %v741, 2
    %v743 = vadd.f32 %v741, %v742
    %v744 = vrot.slane %v743, 1
    %v745 = vadd.f32 %v743, %v744
    %s746 = vtos %v745
    %s747 = sadd.f32 %s730, %s746
    %s748 = smul.f32 %s747, 0.07692308
    %v749 = vmul.f32 %v259, %v259
    %v750 = vmul.f32 %v260, %v260
    %v751 = vsel %vm272, %v749, 0.0
    %752 = vadd.xlane.f32.xlu0 %v751
    %v753 = vpop.xlane.xlu0 %752
    %v754 = vsel %vm272, %v750, 0.0
    %755 = vadd.xlane.f32.xlu0 %v754
    %v756 = vpop.xlane.xlu0 %755
    %v757 = vmax.f32 %v753, 1e-24
    %v758 = vmax.f32 %v756, 1e-24
    %v759 = vrsqrt.pop %v757
    %v760 = vrsqrt.pop %v758
    %v761 = vmul.f32 %v259, %v759
    %v762 = vmul.f32 %v260, %v760
    %v764 = vsel %vm272, %v761, 0
    %v767 = vsel %vm272, %v762, 0
    %769 = vmatprep.subr.mxu0 0.0
    %770 = vmatpush1.xpose.msra.mxu0 %v764
    %771 = vmatprep.subr.mxu0 0.0
    %772 = vmatpush1.xpose.msra.mxu0 %v767
    %773 = vmatprep.subr.mxu0 0.0
    %774 = vmatpush1.xpose.msra.mxu0 0.0
    %775 = vmatprep.subr.mxu0 0.0
    %776 = vmatpush1.xpose.msra.mxu0 0.0
    %777 = vmatprep.subr.mxu0 0.0
    %778 = vmatpush1.xpose.msra.mxu0 0.0
    %779 = vmatprep.subr.mxu0 0.0
    %780 = vmatpush1.xpose.msra.mxu0 0.0
    %781 = vmatprep.subr.mxu0 0.0
    %782 = vmatpush1.xpose.msra.mxu0 0.0
    %783 = vmatprep.subr.mxu0 0.0
    %784 = vmatpush1.xpose.msra.mxu0 0.0
    %785 = vmatprep.subr.mxu0 0.0
    %786 = vmatpush1.xpose.msra.mxu0 0.0
    %787 = vmatprep.subr.mxu0 0.0
    %788 = vmatpush1.xpose.msra.mxu0 0.0
    %789 = vmatprep.subr.mxu0 0.0
    %790 = vmatpush1.xpose.msra.mxu0 0.0
    %791 = vmatprep.subr.mxu0 0.0
    %792 = vmatpush1.xpose.msra.mxu0 0.0
    %793 = vmatprep.subr.mxu0 0.0
    %794 = vmatpush1.xpose.msra.mxu0 0.0
    %795 = vmatprep.subr.mxu0 0.0
    %796 = vmatpush1.xpose.msra.mxu0 0.0
    %797 = vmatprep.subr.mxu0 0.0
    %798 = vmatpush1.xpose.msra.mxu0 0.0
    %799 = vmatprep.subr.mxu0 0.0
    %800 = vmatpush1.xpose.msra.mxu0 0.0
    %801 = vmatprep.subr.mxu0 0.0
    %802 = vmatpush1.xpose.msra.mxu0 0.0
    %803 = vmatprep.subr.mxu0 0.0
    %804 = vmatpush1.xpose.msra.mxu0 0.0
    %805 = vmatprep.subr.mxu0 0.0
    %806 = vmatpush1.xpose.msra.mxu0 0.0
    %807 = vmatprep.subr.mxu0 0.0
    %808 = vmatpush1.xpose.msra.mxu0 0.0
    %809 = vmatprep.subr.mxu0 0.0
    %810 = vmatpush1.xpose.msra.mxu0 0.0
    %811 = vmatprep.subr.mxu0 0.0
    %812 = vmatpush1.xpose.msra.mxu0 0.0
    %813 = vmatprep.subr.mxu0 0.0
    %814 = vmatpush1.xpose.msra.mxu0 0.0
    %815 = vmatprep.subr.mxu0 0.0
    %816 = vmatpush1.xpose.msra.mxu0 0.0
    %817 = vmatprep.subr.mxu0 0.0
    %818 = vmatpush1.xpose.msra.mxu0 0.0
    %819 = vmatprep.subr.mxu0 0.0
    %820 = vmatpush1.xpose.msra.mxu0 0.0
    %821 = vmatprep.subr.mxu0 0.0
    %822 = vmatpush1.xpose.msra.mxu0 0.0
    %823 = vmatprep.subr.mxu0 0.0
    %824 = vmatpush1.xpose.msra.mxu0 0.0
    %825 = vmatprep.subr.mxu0 0.0
    %826 = vmatpush1.xpose.msra.mxu0 0.0
    %827 = vmatprep.subr.mxu0 0.0
    %828 = vmatpush1.xpose.msra.mxu0 0.0
    %829 = vmatprep.subr.mxu0 0.0
    %830 = vmatpush1.xpose.msra.mxu0 0.0
    %831 = vmatprep.subr.mxu0 0.0
    %832 = vmatpush1.xpose.msra.mxu0 0.0
    %833 = vmatprep.mubr.f32.mxu0 0.0
    %834 = vmatmul.mubr.f32.gmra.mrb[0].mxu0 %v764
    %v835 = vpop.f32.mrb[0].mxu0
    %v836 = vadd.f32 0.0, %v835
    %v837 = vpop.f32.mrb[0].mxu0
    %838 = vmatprep.mubr.f32.mxu0 0.0
    %839 = vmatmul.mubr.f32.gmra.mrb[0].mxu0 %v767
    %v840 = vpop.f32.mrb[0].mxu0
    %v841 = vadd.f32 0.0, %v840
    %v842 = vpop.f32.mrb[0].mxu0
    %843 = vdwg.mxu0
    %v844 = vmul.f32 %v836, 14.285714
    %v845 = vmul.f32 %v841, 14.285714
    %v846 = vsub.f32 1.0, %v467
    %v847 = vsub.f32 1.0, %v468
    %v848 = vld [vmem:[%s2] sm:$0x1]
    %v849 = vlaneseq
    %v850 = vshrl.u32 %v849, 7
    %v851 = vsub.s32 0, %v850
    %v852 = vrot.slane %v848, %v851
    %vm853 = vcmp.eq.s32.totalorder %v385, %v852
    %vm854 = vcmp.eq.s32.totalorder %v388, %v852
    %v855 = vsel %vm853, 1, 0
    %v856 = vsel %vm854, 1, 0
    %v857 = vcvt.s32.f32 %v855
    %v858 = vcvt.s32.f32 %v856
    %v859 = vmul.f32 %v857, %v846
    %v860 = vmul.f32 %v858, %v847
    %v861 = vsel %vm57, %v844, -inf
    %862 = vmax.xlane.f32.xlu0 %v861
    %v863 = vpop.xlane.xlu0 %862
    %v864 = vsel %vm57, %v845, -inf
    %865 = vmax.xlane.f32.xlu0 %v864
    %v866 = vpop.xlane.xlu0 %865
    %v867 = vsub.f32 %v844, %v863
    %v868 = vsub.f32 %v845, %v866
    %v869 = vmul.f32 %v867, 1.442695
    %v870 = vpow.pop %v869
    %v871 = vmul.f32 %v868, 1.442695
    %v872 = vpow.pop %v871
    %v873 = vmul.f32 %v870, %v846
    %v874 = vmul.f32 %v872, %v847
    %v875 = vsel %vm57, %v873, 0.0
    %876 = vadd.xlane.f32.xlu0 %v875
    %v877 = vpop.xlane.xlu0 %876
    %v878 = vsel %vm57, %v874, 0.0
    %879 = vadd.xlane.f32.xlu0 %v878
    %v880 = vpop.xlane.xlu0 %879
    %v881 = vlog2.pop %v877
    %v882 = vmul.f32 %v881, 0.6931472
    %v883 = vlog2.pop %v880
    %v884 = vmul.f32 %v883, 0.6931472
    %v885 = vsub.f32 %v867, %v882
    %v886 = vsub.f32 %v868, %v884
    %v887 = vsel %vm57, %v859, 0.0
    %888 = vadd.xlane.f32.xlu0 %v887
    %v889 = vpop.xlane.xlu0 %888
    %v890 = vsel %vm57, %v860, 0.0
    %891 = vadd.xlane.f32.xlu0 %v890
    %v892 = vpop.xlane.xlu0 %891
    %v893 = vmul.f32 %v859, %v885
    %v894 = vmul.f32 %v860, %v886
    %v895 = vsel %vm57, %v893, 0.0
    %896 = vadd.xlane.f32.xlu0 %v895
    %v897 = vpop.xlane.xlu0 %896
    %v898 = vsel %vm57, %v894, 0.0
    %899 = vadd.xlane.f32.xlu0 %v898
    %v900 = vpop.xlane.xlu0 %899
    %v901 = vmax.f32 %v889, 1.0
    %v902 = vmax.f32 %v892, 1.0
    %v903 = vrcp.pop %v901
    %v904 = vmul.f32 %v897, %v903
    %v905 = vrcp.pop %v902
    %v906 = vmul.f32 %v900, %v905
    %v907 = vsub.f32 0.0, %v904
    %v908 = vsub.f32 0.0, %v906
    %v909 = vsel %vm418, %v907, 0.0
    %v910 = vsel %vm418, %v908, 0.0
    %v911 = vadd.f32 %v909, %v910
    %912 = vadd.xlane.f32.xlu0 %v911
    %v913 = vpop.xlane.xlu0 %912
    %v914 = vrot.slane %v913, 4
    %v915 = vadd.f32 %v913, %v914
    %v916 = vrot.slane %v915, 2
    %v917 = vadd.f32 %v915, %v916
    %v918 = vrot.slane %v917, 1
    %v919 = vadd.f32 %v917, %v918
    %s920 = vtos %v919
    %v921 = vrcp.pop 16.0
    %s922 = vtos %v921
    %s923 = smul.f32 %s920, %s922
    %s924 = sadd.f32 %s748, %s923
    %s925 = sadd.f32 %s447, %s924
    %v926 = vstv %s925
    %vm927 = vcmask 0
    %928 = vst.msk [vmem:[#allocation2] sm:$0x1] %vm927, %v926
    // Predicated region
    $region46: #{safaari_forward.1} parent=1 // pred_check
      _
    $region47: #{safaari_forward.1} parent=1 // pred_check_branch
      %930 = sbr.rel (0) target = $region49
    $region48: #{safaari_forward.1} parent=1 // pred_region
      %s932 = ssub.s32 16, 16
      %933 = vsyncadd [#allocation3], %s932
      %s935 = sshll.u32 [#allocation2], 4
      %s936 = int_to_ptr.vmem [resolvable:$true] %s935
      %938 = dma.vmem_to_hbm [thread:$0]  %s936, 16, %s11, [#allocation3]
    $region49: #{safaari_forward.1} parent=1 // pred_fallthru
      _
    // Predicated region
    $region50: #{safaari_forward.1} parent=1 // pred_check
      _
    $region51: #{safaari_forward.1} parent=1 // pred_check_branch
      %940 = sbr.rel (0) target = $region53
    $region52: #{safaari_forward.1} parent=1 // pred_region
      %941 = dma.done [#allocation3], 16
    $region53: #{safaari_forward.1} parent=1 // pred_fallthru
      _
    %942 = vsyncpa [#allocation3], 1

</llo_original>
